<compile_context>
chip_gen: v5e
topology: v5e:2x2
jax: 0.10.0
libtpu: 0.0.40
codegen_flags: <defaults>
</compile_context>

<pallas_src>
import functools

import jax
import jax.numpy as jnp
from jax import lax
from jax.experimental import pallas as pl
from jax.experimental.pallas import tpu as pltpu


def _round_up(x, m):
    return ((x + m - 1) // m) * m


def _sine_kernel(ijk_ref, w_ref, w2_ref, scal_ref, out_ref, *, tb, batch):
    # Scalars live in SMEM: [bias1, bias2, delta].
    b1 = scal_ref[0]
    b2 = scal_ref[1]
    delta = scal_ref[2]

    i_emb = ijk_ref[0]          # (TB, D1)
    j_emb = ijk_ref[1]          # (TB, D1)
    k_emb = ijk_ref[2]          # (TB, D1)

    # Build L = [[i | j], [i | k]] of shape (2*TB, 2*D1) so that
    #   L @ [[W11], [W12]] = [[i@W11 + j@W12], [i@W11 + k@W12]]
    # i.e. both hidden-layer pre-activations from ONE MXU matmul.
    l_top = jnp.concatenate([i_emb, j_emb], axis=1)    # (TB, 2*D1)
    l_bot = jnp.concatenate([i_emb, k_emb], axis=1)    # (TB, 2*D1)
    l_stack = jnp.concatenate([l_top, l_bot], axis=0)  # (2*TB, 2*D1)

    pre = jnp.dot(l_stack, w_ref[...],
                  preferred_element_type=jnp.float32)  # (2*TB, D2) f32
    z = jnp.tanh(pre + b1)                             # one tanh for z11 & z12

    # layer2 as a lane reduction: (2*TB, D2) * (1, D2) -> sum over lanes.
    w2 = w2_ref[...].astype(jnp.float32)               # (1, D2)
    s = jnp.sum(z * w2, axis=-1, keepdims=True)        # (2*TB, 1)
    f = jnp.tanh(s + b2)                               # (2*TB, 1)

    f_pos = f[:tb]                                     # (TB, 1)
    f_neg = f[tb:]                                     # (TB, 1)
    hinge = jnp.maximum(jnp.float32(0.0), f_pos + delta - f_neg)

    # Mask padded rows (tile may extend past the true batch size).
    row = pl.program_id(0) * tb + lax.broadcasted_iota(jnp.int32, (tb, 1), 0)
    hinge = jnp.where(row < batch, hinge, jnp.float32(0.0))

    partial = jnp.sum(hinge)                           # per-tile partial loss
    # Lane-dense, unmasked (8, 128)-aligned store of the per-tile partial.
    out_ref[...] = jnp.broadcast_to(partial, out_ref.shape)


def sine_forward(xi, xj, xk, delta, params, *,
                 mxu_dtype=jnp.float32, max_tile=512):
    """Embedding gather (JAX glue) + gridded Pallas kernel for the hot path."""
    emb_table = params["embeddings"]          # (num_nodes + 1, dim1)
    w11 = params["w11"]                       # (dim1, dim2)  (pre-transposed)
    w12 = params["w12"]                       # (dim1, dim2)
    w2 = params["w2"]                         # (1, dim2)
    bias1 = params["bias1"]                   # (1,)
    bias2 = params["bias2"]                   # (1,)

    B = xi.shape[0]
    D1 = emb_table.shape[1]
    D2 = w11.shape[1]

    # One fused gather for all three index vectors -> (3, B, D1).
    idx = jnp.concatenate([xi, xj, xk])
    emb3 = jnp.take(emb_table, idx, axis=0).reshape(3, B, D1)

    # Batch tiling (8-row aligned; weights stay resident across tiles).
    tb = min(max_tile, _round_up(B, 8))
    b_pad = _round_up(B, tb)
    num_tiles = b_pad // tb
    if b_pad != B:
        emb3 = jnp.pad(emb3, ((0, 0), (0, b_pad - B), (0, 0)))

    # MXU operands optionally in bf16 (halves HBM bytes on the dominant stream);
    # everything past the matmul stays f32.
    emb3 = emb3.astype(mxu_dtype)
    w_stack = jnp.concatenate([w11, w12], axis=0).astype(mxu_dtype)   # (2*D1, D2)
    w2_f32 = w2.astype(jnp.float32)
    scalars = jnp.concatenate([
        bias1.reshape(1).astype(jnp.float32),
        bias2.reshape(1).astype(jnp.float32),
        jnp.asarray(delta, dtype=jnp.float32).reshape(1),
    ])                                                                # (3,)

    kernel = functools.partial(_sine_kernel, tb=tb, batch=B)

    itemsize = jnp.dtype(mxu_dtype).itemsize
    cost = pl.CostEstimate(
        flops=2 * (2 * b_pad) * (2 * D1) * D2 + 6 * (2 * b_pad) * D2,
        transcendentals=2 * b_pad * D2 + 2 * b_pad,
        bytes_accessed=(3 * b_pad * D1 * itemsize
                        + 2 * D1 * D2 * itemsize
                        + D2 * 4
                        + num_tiles * 8 * 128 * 4),
    )

    partials = pl.pallas_call(
        kernel,
        grid=(num_tiles,),
        out_shape=jax.ShapeDtypeStruct((num_tiles, 8, 128), jnp.float32),
        in_specs=[
            # (3, TB, D1) embedding tile, marches along the batch axis.
            pl.BlockSpec((3, tb, D1), lambda t: (0, t, 0)),
            # Stacked weight [[W11],[W12]]: resident (same block every step).
            pl.BlockSpec((2 * D1, D2), lambda t: (0, 0)),
            # layer2 row vector: resident.
            pl.BlockSpec((1, D2), lambda t: (0, 0)),
            # [bias1, bias2, delta] scalars in SMEM.
            pl.BlockSpec(memory_space=pltpu.MemorySpace.SMEM),
        ],
        out_specs=pl.BlockSpec((1, 8, 128), lambda t: (t, 0, 0)),
        compiler_params=pltpu.CompilerParams(
            dimension_semantics=("parallel",)),
        cost_estimate=cost,
    )(emb3, w_stack, w2_f32, scalars)

    # Tiny final reduction of per-tile partials in XLA.
    return jnp.sum(partials[:, 0, 0])


def sine_reference(xi, xj, xk, delta, params):
    """Pure-JAX reference matching the PyTorch forward exactly."""
    emb = params["embeddings"]
    i_emb = jnp.take(emb, xi, axis=0)
    j_emb = jnp.take(emb, xj, axis=0)
    k_emb = jnp.take(emb, xk, axis=0)
    z11 = jnp.tanh(i_emb @ params["w11"] + j_emb @ params["w12"] + params["bias1"])
    z12 = jnp.tanh(i_emb @ params["w11"] + k_emb @ params["w12"] + params["bias1"])
    f_pos = jnp.tanh(jnp.sum(z11 * params["w2"], axis=-1, keepdims=True) + params["bias2"])
    f_neg = jnp.tanh(jnp.sum(z12 * params["w2"], axis=-1, keepdims=True) + params["bias2"])
    return jnp.sum(jnp.maximum(0.0, f_pos + delta - f_neg))


def init_params(key, num_nodes, dim1, dim2):
    k_emb, k_w11, k_w12, k_w2 = jax.random.split(key, 4)
    # nn.Embedding: N(0, 1); nn.Linear(bias=False): uniform(-1/sqrt(fan_in), +1/sqrt(fan_in)).
    embeddings = jax.random.normal(k_emb, (num_nodes + 1, dim1), dtype=jnp.float32)
    lim1 = 1.0 / jnp.sqrt(jnp.float32(dim1))
    lim2 = 1.0 / jnp.sqrt(jnp.float32(dim2))
    # Stored pre-transposed as (in, out) so the kernel does x @ W.
    w11 = jax.random.uniform(k_w11, (dim1, dim2), jnp.float32, -lim1, lim1)
    w12 = jax.random.uniform(k_w12, (dim1, dim2), jnp.float32, -lim1, lim1)
    w2 = jax.random.uniform(k_w2, (1, dim2), jnp.float32, -lim2, lim2)
    bias1 = jnp.zeros((1,), jnp.float32)
    bias2 = jnp.zeros((1,), jnp.float32)
    return dict(embeddings=embeddings, w11=w11, w12=w12, w2=w2,
                bias1=bias1, bias2=bias2)


if __name__ == "__main__":
    num_nodes = 32
    dim1 = 32
    dim2 = 32
    batch = 8
    delta = 1.0

    key = jax.random.PRNGKey(0)
    k_params, k_i, k_j, k_k = jax.random.split(key, 4)
    params = init_params(k_params, num_nodes, dim1, dim2)

    xi = jax.random.randint(k_i, (batch,), 0, num_nodes + 1, dtype=jnp.int32)
    xj = jax.random.randint(k_j, (batch,), 0, num_nodes + 1, dtype=jnp.int32)
    xk = jax.random.randint(k_k, (batch,), 0, num_nodes + 1, dtype=jnp.int32)

    # f32 path, single tile.
    loss = sine_forward(xi, xj, xk, delta, params)
    jax.block_until_ready(loss)
    ref = sine_reference(xi, xj, xk, delta, params)
    jax.block_until_ready(ref)
    assert jnp.allclose(loss, ref, rtol=1e-4, atol=1e-4), (loss, ref)

    # bf16 MXU-operand path (memory-bound win on v6e/v7x), looser tolerance.
    loss_bf16 = sine_forward(xi, xj, xk, delta, params, mxu_dtype=jnp.bfloat16)
    jax.block_until_ready(loss_bf16)
    assert jnp.allclose(loss_bf16, ref, rtol=5e-2, atol=5e-2), (loss_bf16, ref)

    # Multi-tile grid + padded/masked rows (batch not a multiple of the tile).
    batch2 = 300
    k_i2, k_j2, k_k2 = jax.random.split(jax.random.PRNGKey(1), 3)
    xi2 = jax.random.randint(k_i2, (batch2,), 0, num_nodes + 1, dtype=jnp.int32)
    xj2 = jax.random.randint(k_j2, (batch2,), 0, num_nodes + 1, dtype=jnp.int32)
    xk2 = jax.random.randint(k_k2, (batch2,), 0, num_nodes + 1, dtype=jnp.int32)
    loss2 = sine_forward(xi2, xj2, xk2, delta, params, max_tile=128)
    jax.block_until_ready(loss2)
    ref2 = sine_reference(xi2, xj2, xk2, delta, params)
    assert jnp.allclose(loss2, ref2, rtol=1e-4, atol=1e-4), (loss2, ref2)

    print("KERNEL_OK")
</pallas_src>

<mosaic_0001>
module attributes {stable_mosaic.version = 11 : i64} {
  func.func @_sine_kernel(%arg0: i32, %arg1: memref<3x8x32xf32, #tpu.memory_space<vmem>>, %arg2: memref<64x32xf32, #tpu.memory_space<vmem>>, %arg3: memref<1x32xf32, #tpu.memory_space<vmem>>, %arg4: memref<3xf32, #tpu.memory_space<smem>>, %arg5: memref<1x8x128xf32, #tpu.memory_space<vmem>>) attributes {dimension_semantics = [#tpu.dimension_semantics<parallel>], iteration_bounds = array<i64: 1>, scalar_prefetch = 0 : i64, scratch_operands = 0 : i64, tpu.core_type = #tpu.core_type<tc>, window_params = [{transform_indices = @transform_0, window_bounds = array<i64: 3, 8, 32>}, {pipeline_mode = #tpu.pipeline_mode<synchronous>, transform_indices = @transform_1, window_bounds = array<i64: 64, 32>}, {pipeline_mode = #tpu.pipeline_mode<synchronous>, transform_indices = @transform_2, window_bounds = array<i64: 1, 32>}, {transform_indices = @transform_3, window_bounds = array<i64: 3>}, {transform_indices = @transform_4, window_bounds = array<i64: 1, 8, 128>}]} {
    %c0 = arith.constant 0 : index
    %0 = memref.load %arg4[%c0] : memref<3xf32, #tpu.memory_space<smem>>
    %c1 = arith.constant 1 : index
    %1 = memref.load %arg4[%c1] : memref<3xf32, #tpu.memory_space<smem>>
    %c2 = arith.constant 2 : index
    %2 = memref.load %arg4[%c2] : memref<3xf32, #tpu.memory_space<smem>>
    %c0_0 = arith.constant 0 : index
    %c0_1 = arith.constant 0 : index
    %c0_2 = arith.constant 0 : index
    %3 = vector.load %arg1[%c0_0, %c0_1, %c0_2] : memref<3x8x32xf32, #tpu.memory_space<vmem>>, vector<1x8x32xf32>
    %4 = vector.shape_cast %3 : vector<1x8x32xf32> to vector<8x32xf32>
    %c1_3 = arith.constant 1 : index
    %c0_4 = arith.constant 0 : index
    %c0_5 = arith.constant 0 : index
    %5 = vector.load %arg1[%c1_3, %c0_4, %c0_5] : memref<3x8x32xf32, #tpu.memory_space<vmem>>, vector<1x8x32xf32>
    %6 = vector.shape_cast %5 : vector<1x8x32xf32> to vector<8x32xf32>
    %c2_6 = arith.constant 2 : index
    %c0_7 = arith.constant 0 : index
    %c0_8 = arith.constant 0 : index
    %7 = vector.load %arg1[%c2_6, %c0_7, %c0_8] : memref<3x8x32xf32, #tpu.memory_space<vmem>>, vector<1x8x32xf32>
    %8 = vector.shape_cast %7 : vector<1x8x32xf32> to vector<8x32xf32>
    %9 = tpu.concatenate %4, %6 in 1 : vector<8x32xf32>, vector<8x32xf32> -> vector<8x64xf32>
    %10 = tpu.concatenate %4, %8 in 1 : vector<8x32xf32>, vector<8x32xf32> -> vector<8x64xf32>
    %11 = tpu.concatenate %9, %10 in 0 : vector<8x64xf32>, vector<8x64xf32> -> vector<16x64xf32>
    %c0_9 = arith.constant 0 : index
    %c0_10 = arith.constant 0 : index
    %12 = vector.load %arg2[%c0_9, %c0_10] : memref<64x32xf32, #tpu.memory_space<vmem>>, vector<64x32xf32>
    %cst = arith.constant dense<0.000000e+00> : vector<16x32xf32>
    %13 = tpu.matmul %11, %12, %cst {dimension_numbers = #tpu.dot_dimension_numbers<[1], [0], [0], [1], [0, 0, 1, 1], [], []>} : vector<16x64xf32>, vector<64x32xf32>, vector<16x32xf32> -> vector<16x32xf32>
    %14 = vector.broadcast %0 : f32 to vector<16x32xf32>
    %15 = arith.addf %13, %14 : vector<16x32xf32>
    %16 = math.tanh %15 : vector<16x32xf32>
    %c0_11 = arith.constant 0 : index
    %c0_12 = arith.constant 0 : index
    %17 = vector.load %arg3[%c0_11, %c0_12] : memref<1x32xf32, #tpu.memory_space<vmem>>, vector<1x32xf32>
    %18 = vector.broadcast %17 : vector<1x32xf32> to vector<16x32xf32>
    %19 = arith.mulf %16, %18 : vector<16x32xf32>
    %cst_13 = arith.constant dense<0.000000e+00> : vector<16xf32>
    %20 = vector.multi_reduction <add>, %19, %cst_13 [1] : vector<16x32xf32> to vector<16xf32>
    %21 = vector.shape_cast %20 : vector<16xf32> to vector<16x1xf32>
    %22 = vector.broadcast %1 : f32 to vector<16x1xf32>
    %23 = arith.addf %21, %22 : vector<16x1xf32>
    %24 = math.tanh %23 : vector<16x1xf32>
    %25 = vector.extract_strided_slice %24 {offsets = [0, 0], sizes = [8, 1], strides = [1, 1]} : vector<16x1xf32> to vector<8x1xf32>
    %26 = vector.extract_strided_slice %24 {offsets = [8, 0], sizes = [8, 1], strides = [1, 1]} : vector<16x1xf32> to vector<8x1xf32>
    %27 = vector.broadcast %2 : f32 to vector<8x1xf32>
    %28 = arith.addf %25, %27 : vector<8x1xf32>
    %29 = arith.subf %28, %26 : vector<8x1xf32>
    %cst_14 = arith.constant 0.000000e+00 : f32
    %30 = vector.broadcast %cst_14 : f32 to vector<8x1xf32>
    %31 = arith.maximumf %30, %29 : vector<8x1xf32>
    %c8_i32 = arith.constant 8 : i32
    %32 = arith.muli %arg0, %c8_i32 : i32
    %33 = tpu.iota {dimensions = array<i32: 0>} : vector<8x1xi32>
    %34 = vector.broadcast %32 : i32 to vector<8x1xi32>
    %35 = arith.addi %34, %33 : vector<8x1xi32>
    %c8_i32_15 = arith.constant 8 : i32
    %36 = vector.broadcast %c8_i32_15 : i32 to vector<8x1xi32>
    %37 = arith.cmpi slt, %35, %36 : vector<8x1xi32>
    %cst_16 = arith.constant 0.000000e+00 : f32
    %38 = vector.broadcast %cst_16 : f32 to vector<8x1xf32>
    %39 = arith.select %37, %31, %38 : vector<8x1xi1>, vector<8x1xf32>
    %40 = vector.shape_cast %39 : vector<8x1xf32> to vector<1x8x1xf32>
    %cst_17 = arith.constant dense<0.000000e+00> : vector<1xf32>
    %41 = vector.multi_reduction <add>, %40, %cst_17 [1, 2] : vector<1x8x1xf32> to vector<1xf32>
    %42 = vector.shape_cast %41 : vector<1xf32> to vector<1x1x1xf32>
    %43 = vector.extract %42[0, 0, 0] : f32 from vector<1x1x1xf32>
    %44 = vector.broadcast %43 : f32 to vector<1x8x128xf32>
    %c0_18 = arith.constant 0 : index
    %c0_19 = arith.constant 0 : index
    %c0_20 = arith.constant 0 : index
    %45 = vector.load %arg5[%c0_18, %c0_19, %c0_20] : memref<1x8x128xf32, #tpu.memory_space<vmem>>, vector<1x8x128xf32>
    tpu.vector_store %arg5[%c0_18, %c0_19, %c0_20], %44 {strides = array<i32>} : memref<1x8x128xf32, #tpu.memory_space<vmem>>, vector<1x8x128xf32>,
    return
  }
  func.func @transform_0(%arg0: i32) -> (i32, i32, i32) {
    %c0_i32 = arith.constant 0 : i32
    %c0_i32_0 = arith.constant 0 : i32
    %c0_i32_1 = arith.constant 0 : i32
    return %c0_i32, %arg0, %c0_i32_0 : i32, i32, i32
  }
  func.func @transform_1(%arg0: i32) -> (i32, i32) {
    %c0_i32 = arith.constant 0 : i32
    %c0_i32_0 = arith.constant 0 : i32
    %c0_i32_1 = arith.constant 0 : i32
    return %c0_i32, %c0_i32_0 : i32, i32
  }
  func.func @transform_2(%arg0: i32) -> (i32, i32) {
    %c0_i32 = arith.constant 0 : i32
    %c0_i32_0 = arith.constant 0 : i32
    %c0_i32_1 = arith.constant 0 : i32
    return %c0_i32, %c0_i32_0 : i32, i32
  }
  func.func @transform_3(%arg0: i32) -> i32 {
    %c0_i32 = arith.constant 0 : i32
    %c0_i32_0 = arith.constant 0 : i32
    return %c0_i32 : i32
  }
  func.func @transform_4(%arg0: i32) -> (i32, i32, i32) {
    %c0_i32 = arith.constant 0 : i32
    %c0_i32_0 = arith.constant 0 : i32
    %c0_i32_1 = arith.constant 0 : i32
    return %arg0, %c0_i32, %c0_i32_0 : i32, i32, i32
  }
}

</mosaic_0001>

<llo_original>
// kernel: tpu_custom_call.1
$region0: #{tpu_custom_call.1}
  #allocation0 [shape = 'u32[]', space=smem, size = 0x4, offset = 0x4, fixed_abs, tag = 'smem constant byte address 0x4 - core index']
  #allocation1 [shape = 'u32[72,128]{1,0:T(1,128)}', space=vmem, size = 0x9000, scoped, tag = 'internal scratch']
  %s0 = inlined_call_operand.vmem [shape: f32[3,8,32], index: 0, kind: input, shape index: {}]
  %s1 = inlined_call_operand.vmem [shape: f32[64,32], index: 1, kind: input, shape index: {}]
  %s2 = inlined_call_operand.vmem [shape: f32[1,32], index: 2, kind: input, shape index: {}]
  %s3 = inlined_call_operand.vmem [shape: f32[3], index: 3, kind: input, shape index: {}]
  %s4 = inlined_call_operand.hbm [shape: f32[1,8,128], index: 4, kind: output, shape index: {}]
  %s5 = sld [smem:[#allocation0]]
  $region30: #{tpu_custom_call.1} parent=0
    _
  %s7 = ssub.s32 1, %s5
  %s8 = scalar_select 0, %s7, %s5
  $region1: #{tpu_custom_call.1} parent=0
    #allocation2 [shape = 'u8[512]{0}', space=smem, size = 0x200, scoped, tag = 'input window, operand 3, single buffered']
    #allocation3 [shape = 's32[1]{0}', space=sflag, size = 0x4, scoped, tag = 'scoped memory for tpu_custom_call.1']
    #allocation4 [shape = 's32[1]{0}', space=sflag, size = 0x4, scoped, tag = 'scoped memory for tpu_custom_call.1']
    #allocation5 [shape = 'u8[4096]{0}', space=vmem, size = 0x1000, scoped, tag = 'output window, operand 0, single buffered']
    %9 = vsyncpa [#allocation4], 0
    %10 = vsyncpa [#allocation3], 0
    // Predicated region
    $region2: #{tpu_custom_call.1} parent=1 // pred_check
      _
    $region3: #{tpu_custom_call.1} parent=1 // pred_check_branch
      %12 = sbr.rel (0) target = $region5
    $region4: #{tpu_custom_call.1} parent=1 // pred_region
      _
    $region5: #{tpu_custom_call.1} parent=1 // pred_fallthru
      _
    // Predicated region
    $region6: #{tpu_custom_call.1} parent=1 // pred_check
      _
    $region7: #{tpu_custom_call.1} parent=1 // pred_check_branch
      %14 = sbr.rel (0) target = $region9
    $region8: #{tpu_custom_call.1} parent=1 // pred_region
      _
    $region9: #{tpu_custom_call.1} parent=1 // pred_fallthru
      _
    // Predicated region
    $region10: #{tpu_custom_call.1} parent=1 // pred_check
      _
    $region11: #{tpu_custom_call.1} parent=1 // pred_check_branch
      %16 = sbr.rel (0) target = $region13
    $region12: #{tpu_custom_call.1} parent=1 // pred_region
      _
    $region13: #{tpu_custom_call.1} parent=1 // pred_fallthru
      _
    // Predicated region
    $region14: #{tpu_custom_call.1} parent=1 // pred_check
      _
    $region15: #{tpu_custom_call.1} parent=1 // pred_check_branch
      %18 = sbr.rel (0) target = $region17
    $region16: #{tpu_custom_call.1} parent=1 // pred_region
      %20 = vsyncadd [#allocation4], 0
      %s22 = sshll.u32 %s3, 4
      %s23 = int_to_ptr.vmem [resolvable:$true] %s22
      %25 = dma.vmem_to_smem %s23, 16, [#allocation2], [#allocation4]
    $region17: #{tpu_custom_call.1} parent=1 // pred_fallthru
      _
    // Predicated region
    $region18: #{tpu_custom_call.1} parent=1 // pred_check
      _
    $region19: #{tpu_custom_call.1} parent=1 // pred_check_branch
      %27 = sbr.rel (0) target = $region21
    $region20: #{tpu_custom_call.1} parent=1 // pred_region
      %29 = dma.done [#allocation4], 16
    $region21: #{tpu_custom_call.1} parent=1 // pred_fallthru
      _
    %30 = sfence
    %s31 = sld [smem:[#allocation2]]
    %s32 = sld [smem:[#allocation2 + $0x1]]
    %s33 = sld [smem:[#allocation2 + $0x2]]
    %v34 = vld [vmem:[%s0] sm:$0xff]
    %s35 = scalar_lea.vmem %s0, 8
    %v36 = vld [vmem:[%s35] sm:$0xff]
    %s37 = scalar_lea.vmem %s0, 16
    %v38 = vld [vmem:[%s37] sm:$0xff]
    %40 = vrot.lane.b32.xlu0 %v36, 32
    %v41 = vpop.permute.xlu0 %40
    %vm43 = vcmask 261120
    %v44 = vsel %vm43, %v34, %v41
    %46 = vrot.lane.b32.xlu0 %v38, 32
    %v47 = vpop.permute.xlu0 %46
    %v49 = vsel %vm43, %v34, %v47
    %v50 = vld [vmem:[%s1] sm:$0xff]
    %v51 = vld [vmem:[%s1 + $0x8] sm:$0xff]
    %v52 = vld [vmem:[%s1 + $0x10] sm:$0xff]
    %v53 = vld [vmem:[%s1 + $0x18] sm:$0xff]
    %v54 = vld [vmem:[%s1 + $0x20] sm:$0xff]
    %v55 = vld [vmem:[%s1 + $0x28] sm:$0xff]
    %v56 = vld [vmem:[%s1 + $0x30] sm:$0xff]
    %v57 = vld [vmem:[%s1 + $0x38] sm:$0xff]
    %v58 = vstv %s31
    %vm59 = vcmask 523264
    %v61 = vsel %vm59, %v44, 0
    %v64 = vsel %vm59, %v49, 0
    %66 = vmatpush.msra.mxu0 0.0
    %67 = vmatpush.msra.mxu0 0.0
    %68 = vmatpush.msra.mxu0 0.0
    %69 = vmatpush.msra.mxu0 0.0
    %70 = vmatpush.msra.mxu0 0.0
    %71 = vmatpush.msra.mxu0 0.0
    %72 = vmatpush.msra.mxu0 0.0
    %73 = vmatpush.msra.mxu0 0.0
    %74 = vmatpush.msra.mxu0 %v57
    %75 = vmatpush.msra.mxu0 %v56
    %76 = vmatpush.msra.mxu0 %v55
    %77 = vmatpush.msra.mxu0 %v54
    %78 = vmatpush.msra.mxu0 %v53
    %79 = vmatpush.msra.mxu0 %v52
    %80 = vmatpush.msra.mxu0 %v51
    %81 = vmatpush.msra.mxu0 %v50
    %82 = vmatmul.f32.gmra.mxu0 %v61
    %v83 = vpop.f32.mrf.mxu0
    %v84 = vadd.f32 %v58, %v83
    %85 = vmatmul.f32.gmra.mxu0 %v64
    %v86 = vpop.f32.mrf.mxu0
    %v87 = vadd.f32 %v58, %v86
    %88 = vdwg.mxu0
    %v89 = vtanh.pop %v84
    %v90 = vtanh.pop %v87
    %v91 = vld [vmem:[%s2] sm:$0x1]
    %v93 = vperm.slane %v91, 0
    %v95 = vmul.f32 %v89, %v93
    %v96 = vmul.f32 %v90, %v93
    %v97 = vsel %vm43, %v95, 0.0
    %98 = vadd.xlane.f32.xlu0 %v97
    %v99 = vpop.xlane.xlu0 %98
    %v100 = vsel %vm43, %v96, 0.0
    %101 = vadd.xlane.f32.xlu0 %v100
    %v102 = vpop.xlane.xlu0 %101
    %v103 = vstv %s32
    %v104 = vadd.f32 %v99, %v103
    %v105 = vadd.f32 %v102, %v103
    %v106 = vtanh.pop %v104
    %v107 = vtanh.pop %v105
    %v108 = vstv %s33
    %v109 = vadd.f32 %v106, %v108
    %v110 = vsub.f32 %v109, %v107
    %v111 = vmax.f32 %v110, 0.0
    %s112 = smul.u32 0, 8
    %v113 = vlaneseq
    %v114 = vshrl.u32 %v113, 7
    %v115 = vstv %s112
    %v116 = vadd.s32 %v115, %v114
    %vm117 = vcmp.lt.s32.totalorder %v116, 8
    %v118 = vsel %vm117, %v111, 0.0
    %vm119 = vcmask 7168
    %v120 = vsel %vm119, %v118, 0.0
    %121 = vadd.xlane.f32.xlu0 %v120
    %v122 = vpop.xlane.xlu0 %121
    %v123 = vrot.slane %v122, 4
    %v124 = vadd.f32 %v122, %v123
    %v125 = vrot.slane %v124, 2
    %v126 = vadd.f32 %v124, %v125
    %v127 = vrot.slane %v126, 1
    %v128 = vadd.f32 %v126, %v127
    %s129 = vtos %v128
    %v130 = vstv %s129
    %131 = vst [vmem:[#allocation5] sm:$0xff] %v130
    // Predicated region
    $region22: #{tpu_custom_call.1} parent=1 // pred_check
      _
    $region23: #{tpu_custom_call.1} parent=1 // pred_check_branch
      %133 = sbr.rel (0) target = $region25
    $region24: #{tpu_custom_call.1} parent=1 // pred_region
      %135 = vsyncadd [#allocation3], 0
      %s137 = sshll.u32 [#allocation5], 4
      %s138 = int_to_ptr.vmem [resolvable:$true] %s137
      %s139 = sshll.u32 %s4, 4
      %s140 = int_to_ptr.hbm [resolvable:$true] %s139
      %142 = dma.vmem_to_hbm [thread:$0]  %s138, 128, %s140, [#allocation3]
    $region25: #{tpu_custom_call.1} parent=1 // pred_fallthru
      _
    // Predicated region
    $region26: #{tpu_custom_call.1} parent=1 // pred_check
      _
    $region27: #{tpu_custom_call.1} parent=1 // pred_check_branch
      %144 = sbr.rel (0) target = $region29
    $region28: #{tpu_custom_call.1} parent=1 // pred_region
      %146 = dma.done [#allocation3], 128
    $region29: #{tpu_custom_call.1} parent=1 // pred_fallthru
      _
    %147 = vsyncpa [#allocation3], 1
    %148 = vsyncpa [#allocation4], 1

</llo_original>
